<compile_context>
chip_gen: v5e
topology: v5e:2x2
jax: 0.10.0
libtpu: 0.0.40
codegen_flags: <defaults>
</compile_context>

<pallas_src>
import functools
import math

import jax
import jax.numpy as jnp
import numpy as np
from jax.experimental import pallas as pl
from jax.experimental.pallas import tpu as pltpu

DROP_PROB = 0.1
BLOCK_SIZE = 5


def _cdiv(a, b):
    return -(-a // b)


# -----------------------------------------------------------------------------
# Pass 1: mask pass (tiled over batch) — threshold + separable max-pool.
# -----------------------------------------------------------------------------
def _mask_kernel(u_ref, m_ref, *, block_size, gamma):
    # u_ref : (Bt, H + 2p, W + 2p) uniforms padded with 1.0 (1.0 < gamma is
    #         always False since gamma <= 1, so padding never becomes a dropped
    #         seed — equivalent to max_pool2d's implicit padding on a {0,1} mask).
    # m_ref : (Bt, g, H, W) UNscaled block mask (1 keep / 0 drop), replicated
    #         across the channel-group axis g.
    Bt, g, H, W = m_ref.shape
    seed = (u_ref[...] < gamma).astype(jnp.float32)          # (Bt, Hp, Wp)

    # Separable stride-1 max-pool: W (lane) direction first, then H (sublane);
    # 2*(bs-1) maxes instead of bs*bs.  Keeping window starts 0..W-1 / 0..H-1
    # also matches PyTorch's trailing-row/col crop for even block_size.
    pooled_w = seed[:, :, 0:W]
    for dw in range(1, block_size):
        pooled_w = jnp.maximum(pooled_w, seed[:, :, dw:dw + W])
    pooled = pooled_w[:, 0:H, :]
    for dh in range(1, block_size):
        pooled = jnp.maximum(pooled, pooled_w[:, dh:dh + H, :])

    block_mask = (1.0 - pooled).astype(m_ref.dtype)          # (Bt, H, W)
    m_ref[...] = jnp.broadcast_to(block_mask[:, None, :, :], (Bt, g, H, W))


# -----------------------------------------------------------------------------
# Pass 2: hot elementwise multiply, lane-dense, tiled over (B, channel groups).
# -----------------------------------------------------------------------------
def _apply_kernel(scale_ref, m_ref, x_ref, o_ref):
    # scale_ref: (1, 1) f32 in SMEM  (numel / sum(block_mask))
    # m_ref    : (1, 1, L)  {0,1} mask for this batch row (L = g*H*W)
    # x_ref    : (1, Ct, L)
    # o_ref    : (1, Ct, L)
    kept = x_ref[...] * m_ref[...]                            # exact (mask is 0/1)
    # Apply the f32 scale, then cast back to the output dtype (one rounding).
    o_ref[...] = (kept.astype(jnp.float32) * scale_ref[0, 0]).astype(o_ref.dtype)


# -----------------------------------------------------------------------------
# Tiling heuristics (generation-aware).
# -----------------------------------------------------------------------------
def _vmem_budget_bytes():
    """Scoped-VMEM budget for the hot pass, derived from physical VMEM."""
    phys = 64 << 20                      # conservative default = v7x per-core VMEM
    try:
        phys = int(pltpu.get_tpu_info().vmem_capacity_bytes)
    except Exception:
        pass
    # ~5/8 of physical, capped at 64 MiB: v5e/v6e (128 MiB) -> 64 MiB,
    # v7x (64 MiB) -> 40 MiB.  Always above the 16/32 MiB default scoped limits.
    return min(64 << 20, (phys * 5) // 8)


def _pick_group(C, HW):
    """Smallest channel-group size g (dividing C) making g*HW a multiple of 128."""
    g = 128 // math.gcd(HW, 128)
    if g > 1 and C % g == 0:
        return g
    return 1


def _pick_channel_tile(Cg, L, itemsize, vmem_limit, n_batch_steps):
    """Channel tile Ct (multiple of 8, or == Cg) for the (1, Ct, L) hot block.

    Budget ~vmem_limit/6 per block: double-buffered x + out is 4 blocks plus
    the (tiny) mask buffers and headroom.  Capped at 8 MiB per block; keeps the
    ~0.35 us per-grid-step overhead below ~5-7% on all generations.
    """
    target = min(8 << 20, max(1 << 20, vmem_limit // 6))
    ct = max(1, target // (L * itemsize))
    if ct >= Cg:
        ct = Cg
    elif ct >= 8:
        ct = (ct // 8) * 8
    else:
        ct = min(Cg, 8)                  # keep sublane (8) alignment
    # v7x megacore guard: make sure both TensorCores get at least 2 grid steps.
    while ct > 8 and n_batch_steps * _cdiv(Cg, ct) < 4:
        new_ct = max(8, ((ct // 2) + 7) // 8 * 8)
        if new_ct == ct:
            break
        ct = new_ct
    return ct


# -----------------------------------------------------------------------------
# Public entry point.
# -----------------------------------------------------------------------------
def dropblock2d(x, uniform, *, drop_prob=DROP_PROB, block_size=BLOCK_SIZE,
                training=True):
    """x: (B, C, H, W); uniform: (B, H, W) float32 in [0, 1)."""
    assert x.ndim == 4, "Expected input with 4 dims (bsize, channels, h, w)"
    if (not training) or drop_prob == 0.0:
        return x

    B, C, H, W = x.shape
    p = block_size // 2
    gamma = drop_prob / (block_size ** 2)
    assert gamma <= 1.0, "gamma > 1 breaks the pad-with-1.0 trick"

    HW = H * W
    g = _pick_group(C, HW)               # lane-density factor for the hot pass
    Cg = C // g
    L = g * HW
    vmem_limit = _vmem_budget_bytes()

    # ---- Pass 1: unscaled block mask, tiled over batch. ----
    # Wrapper-side pad of the (tiny) uniform array; the halo stays outside the
    # kernel so the separable pool needs no edge masking.
    u_pad = jnp.pad(uniform.astype(jnp.float32), ((0, 0), (p, p), (p, p)),
                    constant_values=1.0)
    Hp, Wp = H + 2 * p, W + 2 * p
    per_b = Hp * Wp * 4 + g * HW * x.dtype.itemsize
    Bt = max(1, min(B, (2 << 20) // per_b))      # ~<=2 MiB per batch tile
    nB1 = _cdiv(B, Bt)

    mask4 = pl.pallas_call(
        functools.partial(_mask_kernel, block_size=block_size, gamma=gamma),
        out_shape=jax.ShapeDtypeStruct((B, g, H, W), x.dtype),
        grid=(nB1,),
        in_specs=[pl.BlockSpec((Bt, Hp, Wp), lambda i: (i, 0, 0))],
        out_specs=pl.BlockSpec((Bt, g, H, W), lambda i: (i, 0, 0, 0)),
        compiler_params=pltpu.CompilerParams(
            dimension_semantics=("parallel",),
            vmem_limit_bytes=vmem_limit),
    )(u_pad)

    # ---- Scalar normalization (tiny, plain JAX): scale = numel / sum. ----
    # Exact: mask values are 0/1 and accumulation is in f32.  Division by zero
    # when every position is dropped matches the PyTorch reference (inf/NaN).
    total = jnp.sum(mask4[:, 0].astype(jnp.float32))
    scale = (jnp.float32(B * H * W) / total).reshape(1, 1)

    # ---- Pass 2: tiled, pipelined multiply with lane-dense blocks. ----
    x3 = x.reshape(B, Cg, L)             # free: contiguous collapse
    m3 = mask4.reshape(B, 1, L)          # free: contiguous collapse
    Ct = _pick_channel_tile(Cg, L, x.dtype.itemsize, vmem_limit, B)
    grid = (B, _cdiv(Cg, Ct))            # c innermost: mask re-DMA is skipped

    out3 = pl.pallas_call(
        _apply_kernel,
        out_shape=jax.ShapeDtypeStruct((B, Cg, L), x.dtype),
        grid=grid,
        in_specs=[
            pl.BlockSpec(memory_space=pltpu.MemorySpace.SMEM),    # scale scalar
            pl.BlockSpec((1, 1, L), lambda b, c: (b, 0, 0)),      # mask
            pl.BlockSpec((1, Ct, L), lambda b, c: (b, c, 0)),     # x
        ],
        out_specs=pl.BlockSpec((1, Ct, L), lambda b, c: (b, c, 0)),
        compiler_params=pltpu.CompilerParams(
            dimension_semantics=("parallel", "parallel"),
            vmem_limit_bytes=vmem_limit),
    )(scale, m3, x3)
    # NOTE: default depth-2 pipelining; only sweep pl.Buffered(3) on the x spec
    # if profiling shows exposed DMA (costs VMEM, which is scarce on v7x).

    return out3.reshape(B, C, H, W)


# -----------------------------------------------------------------------------
# Pure-JAX reference (independent of the kernel) and self-test.
# -----------------------------------------------------------------------------
def _reference(x, uniform, drop_prob=DROP_PROB, block_size=BLOCK_SIZE):
    B, C, H, W = x.shape
    p = block_size // 2
    gamma = drop_prob / (block_size ** 2)
    mask = (uniform < gamma).astype(jnp.float32)
    pooled = jax.lax.reduce_window(
        mask, -jnp.inf, jax.lax.max,
        window_dimensions=(1, block_size, block_size),
        window_strides=(1, 1, 1),
        padding=[(0, 0), (p, p), (p, p)],
    )
    block_mask = 1.0 - pooled
    scale = block_mask.size / jnp.sum(block_mask)
    return x * block_mask[:, None, :, :] * scale


if __name__ == "__main__":
    # TODO(synk): torch.rand's RNG is drawn outside the kernel via jax.random so
    # the Pallas output can be verified deterministically against a reference.
    key = jax.random.PRNGKey(0)
    kx, ku = jax.random.split(key)
    B, C, H, W = 2, 4, 16, 16
    x = jax.random.normal(kx, (B, C, H, W), dtype=jnp.float32)
    uniform = jax.random.uniform(ku, (B, H, W), dtype=jnp.float32)

    out = dropblock2d(x, uniform, drop_prob=DROP_PROB, block_size=BLOCK_SIZE,
                      training=True)
    out = jax.block_until_ready(out)

    ref = jax.block_until_ready(_reference(x, uniform))
    np.testing.assert_allclose(np.asarray(out), np.asarray(ref),
                               rtol=1e-5, atol=1e-5)
    print("KERNEL_OK")
</pallas_src>

<mosaic_0001>
module attributes {stable_mosaic.version = 11 : i64} {
  func.func @_mask_kernel(%arg0: i32, %arg1: memref<2x20x20xf32, #tpu.memory_space<vmem>>, %arg2: memref<2x1x16x16xf32, #tpu.memory_space<vmem>>) attributes {dimension_semantics = [#tpu.dimension_semantics<parallel>], iteration_bounds = array<i64: 1>, scalar_prefetch = 0 : i64, scratch_operands = 0 : i64, tpu.core_type = #tpu.core_type<tc>, window_params = [{transform_indices = @transform_0, window_bounds = array<i64: 2, 20, 20>}, {transform_indices = @transform_1, window_bounds = array<i64: 2, 1, 16, 16>}]} {
    %c0 = arith.constant 0 : index
    %c0_0 = arith.constant 0 : index
    %c0_1 = arith.constant 0 : index
    %0 = vector.load %arg1[%c0, %c0_0, %c0_1] : memref<2x20x20xf32, #tpu.memory_space<vmem>>, vector<2x20x20xf32>
    %cst = arith.constant 4.000000e-03 : f32
    %1 = vector.broadcast %cst : f32 to vector<2x20x20xf32>
    %2 = arith.cmpf olt, %0, %1 : vector<2x20x20xf32>
    %3 = arith.extui %2 : vector<2x20x20xi1> to vector<2x20x20xi32>
    %4 = arith.sitofp %3 : vector<2x20x20xi32> to vector<2x20x20xf32>
    %5 = vector.extract_strided_slice %4 {offsets = [0, 0, 0], sizes = [2, 20, 16], strides = [1, 1, 1]} : vector<2x20x20xf32> to vector<2x20x16xf32>
    %6 = vector.extract_strided_slice %4 {offsets = [0, 0, 1], sizes = [2, 20, 16], strides = [1, 1, 1]} : vector<2x20x20xf32> to vector<2x20x16xf32>
    %7 = arith.maximumf %5, %6 : vector<2x20x16xf32>
    %8 = vector.extract_strided_slice %4 {offsets = [0, 0, 2], sizes = [2, 20, 16], strides = [1, 1, 1]} : vector<2x20x20xf32> to vector<2x20x16xf32>
    %9 = arith.maximumf %7, %8 : vector<2x20x16xf32>
    %10 = vector.extract_strided_slice %4 {offsets = [0, 0, 3], sizes = [2, 20, 16], strides = [1, 1, 1]} : vector<2x20x20xf32> to vector<2x20x16xf32>
    %11 = arith.maximumf %9, %10 : vector<2x20x16xf32>
    %12 = vector.extract_strided_slice %4 {offsets = [0, 0, 4], sizes = [2, 20, 16], strides = [1, 1, 1]} : vector<2x20x20xf32> to vector<2x20x16xf32>
    %13 = arith.maximumf %11, %12 : vector<2x20x16xf32>
    %14 = vector.extract_strided_slice %13 {offsets = [0, 0, 0], sizes = [2, 16, 16], strides = [1, 1, 1]} : vector<2x20x16xf32> to vector<2x16x16xf32>
    %15 = vector.extract_strided_slice %13 {offsets = [0, 1, 0], sizes = [2, 16, 16], strides = [1, 1, 1]} : vector<2x20x16xf32> to vector<2x16x16xf32>
    %16 = arith.maximumf %14, %15 : vector<2x16x16xf32>
    %17 = vector.extract_strided_slice %13 {offsets = [0, 2, 0], sizes = [2, 16, 16], strides = [1, 1, 1]} : vector<2x20x16xf32> to vector<2x16x16xf32>
    %18 = arith.maximumf %16, %17 : vector<2x16x16xf32>
    %19 = vector.extract_strided_slice %13 {offsets = [0, 3, 0], sizes = [2, 16, 16], strides = [1, 1, 1]} : vector<2x20x16xf32> to vector<2x16x16xf32>
    %20 = arith.maximumf %18, %19 : vector<2x16x16xf32>
    %21 = vector.extract_strided_slice %13 {offsets = [0, 4, 0], sizes = [2, 16, 16], strides = [1, 1, 1]} : vector<2x20x16xf32> to vector<2x16x16xf32>
    %22 = arith.maximumf %20, %21 : vector<2x16x16xf32>
    %cst_2 = arith.constant 1.000000e+00 : f32
    %23 = vector.broadcast %cst_2 : f32 to vector<2x16x16xf32>
    %24 = arith.subf %23, %22 : vector<2x16x16xf32>
    %25 = vector.shape_cast %24 : vector<2x16x16xf32> to vector<2x1x16x16xf32>
    %c0_3 = arith.constant 0 : index
    %c0_4 = arith.constant 0 : index
    %c0_5 = arith.constant 0 : index
    %c0_6 = arith.constant 0 : index
    %26 = vector.load %arg2[%c0_3, %c0_4, %c0_5, %c0_6] : memref<2x1x16x16xf32, #tpu.memory_space<vmem>>, vector<2x1x16x16xf32>
    tpu.vector_store %arg2[%c0_3, %c0_4, %c0_5, %c0_6], %25 {strides = array<i32>} : memref<2x1x16x16xf32, #tpu.memory_space<vmem>>, vector<2x1x16x16xf32>,
    return
  }
  func.func @transform_0(%arg0: i32) -> (i32, i32, i32) {
    %c0_i32 = arith.constant 0 : i32
    %c0_i32_0 = arith.constant 0 : i32
    %c0_i32_1 = arith.constant 0 : i32
    return %arg0, %c0_i32, %c0_i32_0 : i32, i32, i32
  }
  func.func @transform_1(%arg0: i32) -> (i32, i32, i32, i32) {
    %c0_i32 = arith.constant 0 : i32
    %c0_i32_0 = arith.constant 0 : i32
    %c0_i32_1 = arith.constant 0 : i32
    %c0_i32_2 = arith.constant 0 : i32
    return %arg0, %c0_i32, %c0_i32_0, %c0_i32_1 : i32, i32, i32, i32
  }
}

</mosaic_0001>

<llo_original>
// kernel: tpu_custom_call.1
$region0: #{tpu_custom_call.1}
  #allocation0 [shape = 'u32[]', space=smem, size = 0x4, offset = 0x4, fixed_abs, tag = 'smem constant byte address 0x4 - core index']
  #allocation1 [shape = 'u32[72,128]{1,0:T(1,128)}', space=vmem, size = 0x9000, scoped, tag = 'internal scratch']
  %s0 = inlined_call_operand.vmem [shape: f32[2,20,20], index: 0, kind: input, shape index: {}]
  %s1 = inlined_call_operand.hbm [shape: f32[2,1,16,16], index: 1, kind: output, shape index: {}]
  %s2 = sld [smem:[#allocation0]]
  $region14: #{tpu_custom_call.1} parent=0
    _
  %s4 = ssub.s32 1, %s2
  %s5 = scalar_select 0, %s4, %s2
  $region1: #{tpu_custom_call.1} parent=0
    #allocation2 [shape = 'u8[16384]{0}', space=vmem, size = 0x4000, scoped, tag = 'output window, operand 0, single buffered']
    #allocation3 [shape = 's32[1]{0}', space=sflag, size = 0x4, scoped, tag = 'scoped memory for tpu_custom_call.1']
    %6 = vsyncpa [#allocation3], 0
    // Predicated region
    $region2: #{tpu_custom_call.1} parent=1 // pred_check
      _
    $region3: #{tpu_custom_call.1} parent=1 // pred_check_branch
      %8 = sbr.rel (0) target = $region5
    $region4: #{tpu_custom_call.1} parent=1 // pred_region
      _
    $region5: #{tpu_custom_call.1} parent=1 // pred_fallthru
      _
    %v9 = vld [vmem:[%s0] sm:$0xff]
    %v10 = vld [vmem:[%s0 + $0x8] sm:$0xff]
    %v11 = vld [vmem:[%s0 + $0x10] sm:$0xf]
    %v12 = vld [vmem:[%s0 + $0x18] sm:$0xff]
    %v13 = vld [vmem:[%s0 + $0x20] sm:$0xff]
    %v14 = vld [vmem:[%s0 + $0x28] sm:$0xf]
    %vm15 = vcmp.lt.f32.partialorder %v9, 0.004
    %vm16 = vcmp.lt.f32.partialorder %v10, 0.004
    %vm17 = vcmp.lt.f32.partialorder %v11, 0.004
    %vm18 = vcmp.lt.f32.partialorder %v12, 0.004
    %vm19 = vcmp.lt.f32.partialorder %v13, 0.004
    %vm20 = vcmp.lt.f32.partialorder %v14, 0.004
    %v21 = vsel %vm15, 1, 0
    %v22 = vsel %vm16, 1, 0
    %v23 = vsel %vm17, 1, 0
    %v24 = vsel %vm18, 1, 0
    %v25 = vsel %vm19, 1, 0
    %v26 = vsel %vm20, 1, 0
    %v27 = vcvt.s32.f32 %v21
    %v28 = vcvt.s32.f32 %v22
    %v29 = vcvt.s32.f32 %v23
    %v30 = vcvt.s32.f32 %v24
    %v31 = vcvt.s32.f32 %v25
    %v32 = vcvt.s32.f32 %v26
    %39 = vrot.lane.b32.xlu0 %v27, 127
    %v40 = vpop.permute.xlu0 %39
    %41 = vrot.lane.b32.xlu0 %v28, 127
    %v42 = vpop.permute.xlu0 %41
    %43 = vrot.lane.b32.xlu0 %v29, 127
    %v44 = vpop.permute.xlu0 %43
    %45 = vrot.lane.b32.xlu0 %v30, 127
    %v46 = vpop.permute.xlu0 %45
    %47 = vrot.lane.b32.xlu0 %v31, 127
    %v48 = vpop.permute.xlu0 %47
    %49 = vrot.lane.b32.xlu0 %v32, 127
    %v50 = vpop.permute.xlu0 %49
    %v57 = vmax.f32 %v27, %v40
    %v58 = vmax.f32 %v28, %v42
    %v59 = vmax.f32 %v29, %v44
    %v60 = vmax.f32 %v30, %v46
    %v61 = vmax.f32 %v31, %v48
    %v62 = vmax.f32 %v32, %v50
    %63 = vrot.lane.b32.xlu0 %v27, 126
    %v64 = vpop.permute.xlu0 %63
    %65 = vrot.lane.b32.xlu0 %v28, 126
    %v66 = vpop.permute.xlu0 %65
    %67 = vrot.lane.b32.xlu0 %v29, 126
    %v68 = vpop.permute.xlu0 %67
    %69 = vrot.lane.b32.xlu0 %v30, 126
    %v70 = vpop.permute.xlu0 %69
    %71 = vrot.lane.b32.xlu0 %v31, 126
    %v72 = vpop.permute.xlu0 %71
    %73 = vrot.lane.b32.xlu0 %v32, 126
    %v74 = vpop.permute.xlu0 %73
    %v81 = vmax.f32 %v57, %v64
    %v82 = vmax.f32 %v58, %v66
    %v83 = vmax.f32 %v59, %v68
    %v84 = vmax.f32 %v60, %v70
    %v85 = vmax.f32 %v61, %v72
    %v86 = vmax.f32 %v62, %v74
    %87 = vrot.lane.b32.xlu0 %v27, 125
    %v88 = vpop.permute.xlu0 %87
    %89 = vrot.lane.b32.xlu0 %v28, 125
    %v90 = vpop.permute.xlu0 %89
    %91 = vrot.lane.b32.xlu0 %v29, 125
    %v92 = vpop.permute.xlu0 %91
    %93 = vrot.lane.b32.xlu0 %v30, 125
    %v94 = vpop.permute.xlu0 %93
    %95 = vrot.lane.b32.xlu0 %v31, 125
    %v96 = vpop.permute.xlu0 %95
    %97 = vrot.lane.b32.xlu0 %v32, 125
    %v98 = vpop.permute.xlu0 %97
    %v105 = vmax.f32 %v81, %v88
    %v106 = vmax.f32 %v82, %v90
    %v107 = vmax.f32 %v83, %v92
    %v108 = vmax.f32 %v84, %v94
    %v109 = vmax.f32 %v85, %v96
    %v110 = vmax.f32 %v86, %v98
    %111 = vrot.lane.b32.xlu0 %v27, 124
    %v112 = vpop.permute.xlu0 %111
    %113 = vrot.lane.b32.xlu0 %v28, 124
    %v114 = vpop.permute.xlu0 %113
    %115 = vrot.lane.b32.xlu0 %v29, 124
    %v116 = vpop.permute.xlu0 %115
    %117 = vrot.lane.b32.xlu0 %v30, 124
    %v118 = vpop.permute.xlu0 %117
    %119 = vrot.lane.b32.xlu0 %v31, 124
    %v120 = vpop.permute.xlu0 %119
    %121 = vrot.lane.b32.xlu0 %v32, 124
    %v122 = vpop.permute.xlu0 %121
    %v129 = vmax.f32 %v105, %v112
    %v130 = vmax.f32 %v106, %v114
    %v131 = vmax.f32 %v107, %v116
    %v132 = vmax.f32 %v108, %v118
    %v133 = vmax.f32 %v109, %v120
    %v134 = vmax.f32 %v110, %v122
    %vm141 = vcmask 1046528
    %v142 = vrot.slane %v129, 1
    %v143 = vrot.slane %v130, 1
    %v144 = vsel %vm141, %v142, %v143
    %v145 = vrot.slane %v131, 1
    %v146 = vsel %vm141, %v143, %v145
    %v147 = vrot.slane %v132, 1
    %v148 = vrot.slane %v133, 1
    %v149 = vsel %vm141, %v147, %v148
    %v150 = vrot.slane %v134, 1
    %v151 = vsel %vm141, %v148, %v150
    %v156 = vmax.f32 %v129, %v144
    %v157 = vmax.f32 %v130, %v146
    %v158 = vmax.f32 %v132, %v149
    %v159 = vmax.f32 %v133, %v151
    %vm160 = vcmask 1045504
    %v161 = vrot.slane %v129, 2
    %v162 = vrot.slane %v130, 2
    %v163 = vsel %vm160, %v161, %v162
    %v164 = vrot.slane %v131, 2
    %v165 = vsel %vm160, %v162, %v164
    %v166 = vrot.slane %v132, 2
    %v167 = vrot.slane %v133, 2
    %v168 = vsel %vm160, %v166, %v167
    %v169 = vrot.slane %v134, 2
    %v170 = vsel %vm160, %v167, %v169
    %v175 = vmax.f32 %v156, %v163
    %v176 = vmax.f32 %v157, %v165
    %v177 = vmax.f32 %v158, %v168
    %v178 = vmax.f32 %v159, %v170
    %vm179 = vcmask 1044480
    %v180 = vrot.slane %v129, 3
    %v181 = vrot.slane %v130, 3
    %v182 = vsel %vm179, %v180, %v181
    %v183 = vrot.slane %v131, 3
    %v184 = vsel %vm179, %v181, %v183
    %v185 = vrot.slane %v132, 3
    %v186 = vrot.slane %v133, 3
    %v187 = vsel %vm179, %v185, %v186
    %v188 = vrot.slane %v134, 3
    %v189 = vsel %vm179, %v186, %v188
    %v194 = vmax.f32 %v175, %v182
    %v195 = vmax.f32 %v176, %v184
    %v196 = vmax.f32 %v177, %v187
    %v197 = vmax.f32 %v178, %v189
    %vm198 = vcmask 1043456
    %v199 = vrot.slane %v129, 4
    %v200 = vrot.slane %v130, 4
    %v201 = vsel %vm198, %v199, %v200
    %v202 = vrot.slane %v131, 4
    %v203 = vsel %vm198, %v200, %v202
    %v204 = vrot.slane %v132, 4
    %v205 = vrot.slane %v133, 4
    %v206 = vsel %vm198, %v204, %v205
    %v207 = vrot.slane %v134, 4
    %v208 = vsel %vm198, %v205, %v207
    %v213 = vmax.f32 %v194, %v201
    %v214 = vmax.f32 %v195, %v203
    %v215 = vmax.f32 %v196, %v206
    %v216 = vmax.f32 %v197, %v208
    %v217 = vsub.f32 1.0, %v213
    %v218 = vsub.f32 1.0, %v214
    %v219 = vsub.f32 1.0, %v215
    %v220 = vsub.f32 1.0, %v216
    %vm221 = vcmask 130048
    %222 = vst.msk [vmem:[#allocation2] sm:$0xff] %vm221, %v217
    %223 = vst.msk [vmem:[#allocation2 + $0x8] sm:$0xff] %vm221, %v218
    %224 = vst.msk [vmem:[#allocation2 + $0x10] sm:$0xff] %vm221, %v219
    %225 = vst.msk [vmem:[#allocation2 + $0x18] sm:$0xff] %vm221, %v220
    // Predicated region
    $region6: #{tpu_custom_call.1} parent=1 // pred_check
      _
    $region7: #{tpu_custom_call.1} parent=1 // pred_check_branch
      %227 = sbr.rel (0) target = $region9
    $region8: #{tpu_custom_call.1} parent=1 // pred_region
      %229 = vsyncadd [#allocation3], 0
      %s230 = sshll.u32 [#allocation2], 4
      %s231 = int_to_ptr.vmem [resolvable:$true] %s230
      %s232 = sshll.u32 %s1, 4
      %s233 = int_to_ptr.hbm [resolvable:$true] %s232
      %238 = dma.vmem_to_hbm [thread:$0]  %s231, 512, %s233, [#allocation3], 128, 128, 8
    $region9: #{tpu_custom_call.1} parent=1 // pred_fallthru
      _
    // Predicated region
    $region10: #{tpu_custom_call.1} parent=1 // pred_check
      _
    $region11: #{tpu_custom_call.1} parent=1 // pred_check_branch
      %240 = sbr.rel (0) target = $region13
    $region12: #{tpu_custom_call.1} parent=1 // pred_region
      %242 = dma.done [#allocation3], 512
    $region13: #{tpu_custom_call.1} parent=1 // pred_fallthru
      _
    %243 = vsyncpa [#allocation3], 1

</llo_original>
